<compile_context>
chip_gen: v7x
topology: tpu7x:2x2x1
jax: 0.10.0
libtpu: 0.0.40
codegen_flags: <defaults>
</compile_context>

<pallas_src>
import functools

import numpy as np
import jax
import jax.numpy as jnp
from jax.experimental import pallas as pl
from jax.experimental.pallas import tpu as pltpu


def _bilinear_matrix(in_size: int, out_size: int) -> np.ndarray:
    """Interpolation matrix matching nn.Upsample(mode='bilinear', align_corners=False)."""
    scale = in_size / out_size
    dst = np.arange(out_size, dtype=np.float64)
    src = np.maximum((dst + 0.5) * scale - 0.5, 0.0)
    i0 = np.minimum(np.floor(src).astype(np.int64), in_size - 1)
    i1 = np.minimum(i0 + 1, in_size - 1)
    w1 = np.clip(src - i0, 0.0, 1.0)
    w0 = 1.0 - w1
    A = np.zeros((out_size, in_size), dtype=np.float64)
    A[np.arange(out_size), i0] += w0
    A[np.arange(out_size), i1] += w1
    return A


@functools.lru_cache(maxsize=None)
def _upsample_matrix_t(in_size: int, out_size: int) -> np.ndarray:
    """Transposed combined 2-D bilinear matrix: (in*in, out*out), float32."""
    A = _bilinear_matrix(in_size, out_size)
    up = np.einsum('Hh,Ww->HWhw', A, A).reshape(out_size * out_size, in_size * in_size)
    return np.ascontiguousarray(up.T).astype(np.float32)


def _merge_feature_kernel(x_ref, wt_ref, b_ref, upt_ref, o_ref):
    # x_ref  : (TB, 16, 128)  bf16  pooled + shuffled input [batch, spatial, conv-in-ch]
    # wt_ref : (128, 256)     bf16  1x1 conv weight, transposed (in, out)
    # b_ref  : (1, 256)       f32   conv bias
    # upt_ref: (16, 169)      bf16  transposed combined bilinear matrix (4x4 -> 13x13)
    # o_ref  : (TB, 256, 169) f32   output, NCHW-flat (channel-major, spatial flattened)
    tb = x_ref.shape[0]
    feat = wt_ref.shape[1]
    hw = upt_ref.shape[1]

    # 1x1 conv: ONE MXU matmul with batch folded into M.
    # M = TB*16, K = 128, N = 256; bf16 x bf16 -> f32 accumulate.
    v2d = x_ref[...].reshape(tb * 16, 128)
    conv = jnp.dot(v2d, wt_ref[...], preferred_element_type=jnp.float32) + b_ref[...]

    # Rearrange to channel-major per batch: (TB*256, 16).  Minor-dims transpose
    # (XLU); surrounding reshapes are sublane-tile aligned (16, 256 % 8 == 0).
    # Cast to bf16 afterwards so the K=16 matmul below is single-pass on the MXU.
    conv_t = jnp.transpose(conv.reshape(tb, 16, feat), (0, 2, 1)).reshape(tb * feat, 16)
    conv_t = conv_t.astype(jnp.bfloat16)

    # Bilinear upsample 4x4 -> 13x13 for all batches & channels in one matmul:
    # (TB*256, 16) @ (16, 169), bf16 x bf16 -> f32.
    out_t = jnp.dot(conv_t, upt_ref[...], preferred_element_type=jnp.float32)
    o_ref[...] = out_t.reshape(tb, feat, hw)


def _pick_tb(B: int) -> int:
    """Largest batch tile <= 16 that divides B; prefer an even step count >= 2."""
    cap = min(16, B)
    divisors = [t for t in range(cap, 0, -1) if B % t == 0]
    even_steps = [t for t in divisors if (B // t) >= 2 and (B // t) % 2 == 0]
    ge2_steps = [t for t in divisors if (B // t) >= 2]
    if even_steps:
        return even_steps[0]
    if ge2_steps:
        return ge2_steps[0]
    return divisors[0]   # B == 1


@functools.partial(jax.jit, static_argnames=("feature_size", "tb"))
def merge_feature_tsm(x, weight, bias, *, feature_size=256, tb=None):
    B, L, C = x.shape
    assert (L, C) == (128, 128), "module hard-codes 128*(L//8)=2048 and 128 in-channels"
    P, K, HW = 16, 128, 13 * 13

    if tb is None:
        tb = _pick_tb(B)
    tb = max(1, min(tb, B))

    # Prep pass (glue, done where x is already being touched): MaxPool1d(8) and the
    # .view(B,4,4,128)-implied channel interleave.  Pooling here shrinks the kernel's
    # input DMA 8x (8 KB/batch instead of 64 KB/batch).
    #   pooled[b, m, c] = max_a x[b, m*8 + a, c]
    #   kernel wants   V[b, p, k] = pooled[b, m = k%16, c = 8*p + k//16]
    pooled = jnp.max(x.reshape(B, P, 8, K), axis=2)                     # (B, 16, 128) [b,m,c]
    xprep = jnp.transpose(pooled.reshape(B, P, 16, 8), (0, 2, 3, 1))    # [b, ch, cl, m]
    xprep = xprep.reshape(B, P, K).astype(jnp.bfloat16)                 # (B, 16, 128)

    B_pad = pl.cdiv(B, tb) * tb
    if B_pad != B:   # only reachable with an explicit, non-dividing user tb
        xprep = jnp.pad(xprep, ((0, B_pad - B), (0, 0), (0, 0)))

    wt = weight.T.astype(jnp.bfloat16)                                  # (128, 256)
    b2 = bias.reshape(1, feature_size).astype(jnp.float32)              # (1, 256)
    upt = jnp.asarray(_upsample_matrix_t(4, 13), dtype=jnp.bfloat16)    # (16, 169)

    out = pl.pallas_call(
        _merge_feature_kernel,
        out_shape=jax.ShapeDtypeStruct((B_pad, feature_size, HW), jnp.float32),
        grid_spec=pltpu.PrefetchScalarGridSpec(
            num_scalar_prefetch=0,
            grid=(B_pad // tb,),
            in_specs=[
                pl.BlockSpec((tb, P, K), lambda b: (b, 0, 0)),
                pl.BlockSpec((K, feature_size), lambda b: (0, 0)),
                pl.BlockSpec((1, feature_size), lambda b: (0, 0)),
                pl.BlockSpec((P, HW), lambda b: (0, 0)),
            ],
            out_specs=pl.BlockSpec((tb, feature_size, HW), lambda b: (b, 0, 0)),
        ),
        compiler_params=pltpu.CompilerParams(
            dimension_semantics=("parallel",),
            vmem_limit_bytes=32 * 1024 * 1024,
        ),
    )(xprep, wt, b2, upt)

    if B_pad != B:
        out = out[:B]
    # NCHW output (B, 256, 13, 13): pure reshape of the minor dim, no transpose pass.
    return out.reshape(B, feature_size, 13, 13)


def _reference(x, weight, bias):
    """Pure-JAX (f32) replica of the PyTorch forward, for correctness checking."""
    B = x.shape[0]
    A = jnp.asarray(_bilinear_matrix(4, 13), dtype=jnp.float32)
    xp = jnp.transpose(x, (0, 2, 1))                      # (B, 128, 128)
    pooled = jnp.max(xp.reshape(B, 128, 16, 8), axis=-1)  # MaxPool1d(8) -> (B,128,16)
    v = pooled.reshape(B, 4, 4, 128)                      # .view(B,4,4,128)
    conv = jnp.einsum('bhwk,ok->bohw', v, weight) + bias[None, :, None, None]
    return jnp.einsum('Hh,bohw,Ww->boHW', A, conv, A)     # bilinear 4x4 -> 13x13


if __name__ == "__main__":
    key = jax.random.PRNGKey(0)
    kx, kw, kb = jax.random.split(key, 3)
    B, L, C = 4, 128, 128        # L=128 forced by .view(B,4,4,128) after MaxPool1d(8)
    feature_size = 256

    x = jax.random.normal(kx, (B, L, C), dtype=jnp.float32)
    # Conv2d(128, 256, kernel_size=1): weight (256,128,1,1) -> stored as (256,128)
    weight = jax.random.normal(kw, (feature_size, C), dtype=jnp.float32) * 0.05
    bias = jax.random.normal(kb, (feature_size,), dtype=jnp.float32) * 0.05

    out = merge_feature_tsm(x, weight, bias, feature_size=feature_size)
    out = jax.block_until_ready(out)

    ref = _reference(x, weight, bias)
    assert out.shape == (B, feature_size, 13, 13)
    # Matmuls run with bf16 operands (f32 accumulation) per the perf review, so the
    # comparison against the full-f32 reference uses a correspondingly relaxed tolerance.
    assert jnp.allclose(out, ref, atol=5e-2, rtol=5e-2)
    print("KERNEL_OK")
</pallas_src>

<mosaic_0001>
module attributes {stable_mosaic.version = 11 : i64} {
  func.func @_merge_feature_kernel(%arg0: i32, %arg1: memref<2x16x128xbf16, #tpu.memory_space<vmem>>, %arg2: memref<128x256xbf16, #tpu.memory_space<vmem>>, %arg3: memref<1x256xf32, #tpu.memory_space<vmem>>, %arg4: memref<16x169xbf16, #tpu.memory_space<vmem>>, %arg5: memref<2x256x169xf32, #tpu.memory_space<vmem>>) attributes {dimension_semantics = [#tpu.dimension_semantics<parallel>], iteration_bounds = array<i64: 2>, scalar_prefetch = 0 : i64, scratch_operands = 0 : i64, tpu.core_type = #tpu.core_type<tc>, window_params = [{transform_indices = @transform_0, window_bounds = array<i64: 2, 16, 128>}, {pipeline_mode = #tpu.pipeline_mode<synchronous>, transform_indices = @transform_1, window_bounds = array<i64: 128, 256>}, {pipeline_mode = #tpu.pipeline_mode<synchronous>, transform_indices = @transform_2, window_bounds = array<i64: 1, 256>}, {pipeline_mode = #tpu.pipeline_mode<synchronous>, transform_indices = @transform_3, window_bounds = array<i64: 16, 169>}, {transform_indices = @transform_4, window_bounds = array<i64: 2, 256, 169>}]} {
    %c0 = arith.constant 0 : index
    %c0_0 = arith.constant 0 : index
    %c0_1 = arith.constant 0 : index
    %0 = vector.load %arg1[%c0, %c0_0, %c0_1] : memref<2x16x128xbf16, #tpu.memory_space<vmem>>, vector<2x16x128xbf16>
    %1 = vector.shape_cast %0 : vector<2x16x128xbf16> to vector<32x128xbf16>
    %c0_2 = arith.constant 0 : index
    %c0_3 = arith.constant 0 : index
    %2 = vector.load %arg2[%c0_2, %c0_3] : memref<128x256xbf16, #tpu.memory_space<vmem>>, vector<128x256xbf16>
    %cst = arith.constant dense<0.000000e+00> : vector<32x256xf32>
    %3 = tpu.matmul %1, %2, %cst {dimension_numbers = #tpu.dot_dimension_numbers<[1], [0], [0], [1], [0, 0, 1, 1], [], []>} : vector<32x128xbf16>, vector<128x256xbf16>, vector<32x256xf32> -> vector<32x256xf32>
    %c0_4 = arith.constant 0 : index
    %c0_5 = arith.constant 0 : index
    %4 = vector.load %arg3[%c0_4, %c0_5] : memref<1x256xf32, #tpu.memory_space<vmem>>, vector<1x256xf32>
    %5 = vector.broadcast %4 : vector<1x256xf32> to vector<32x256xf32>
    %6 = arith.addf %3, %5 : vector<32x256xf32>
    %7 = vector.shape_cast %6 : vector<32x256xf32> to vector<2x16x256xf32>
    %8 = tpu.transpose %7, [0, 2, 1] : vector<2x16x256xf32> -> vector<2x256x16xf32>
    %9 = vector.shape_cast %8 : vector<2x256x16xf32> to vector<512x16xf32>
    %10 = arith.truncf %9 : vector<512x16xf32> to vector<512x16xbf16>
    %c0_6 = arith.constant 0 : index
    %c0_7 = arith.constant 0 : index
    %11 = vector.load %arg4[%c0_6, %c0_7] : memref<16x169xbf16, #tpu.memory_space<vmem>>, vector<16x169xbf16>
    %cst_8 = arith.constant dense<0.000000e+00> : vector<512x169xf32>
    %12 = tpu.matmul %10, %11, %cst_8 {dimension_numbers = #tpu.dot_dimension_numbers<[1], [0], [0], [1], [0, 0, 1, 1], [], []>} : vector<512x16xbf16>, vector<16x169xbf16>, vector<512x169xf32> -> vector<512x169xf32>
    %13 = vector.shape_cast %12 : vector<512x169xf32> to vector<2x256x169xf32>
    %c0_9 = arith.constant 0 : index
    %c0_10 = arith.constant 0 : index
    %c0_11 = arith.constant 0 : index
    %14 = vector.load %arg5[%c0_9, %c0_10, %c0_11] : memref<2x256x169xf32, #tpu.memory_space<vmem>>, vector<2x256x169xf32>
    tpu.vector_store %arg5[%c0_9, %c0_10, %c0_11], %13 {strides = array<i32>} : memref<2x256x169xf32, #tpu.memory_space<vmem>>, vector<2x256x169xf32>,
    return
  }
  func.func @transform_0(%arg0: i32) -> (i32, i32, i32) {
    %c0_i32 = arith.constant 0 : i32
    %c0_i32_0 = arith.constant 0 : i32
    %c0_i32_1 = arith.constant 0 : i32
    return %arg0, %c0_i32, %c0_i32_0 : i32, i32, i32
  }
  func.func @transform_1(%arg0: i32) -> (i32, i32) {
    %c0_i32 = arith.constant 0 : i32
    %c0_i32_0 = arith.constant 0 : i32
    %c0_i32_1 = arith.constant 0 : i32
    return %c0_i32, %c0_i32_0 : i32, i32
  }
  func.func @transform_2(%arg0: i32) -> (i32, i32) {
    %c0_i32 = arith.constant 0 : i32
    %c0_i32_0 = arith.constant 0 : i32
    %c0_i32_1 = arith.constant 0 : i32
    return %c0_i32, %c0_i32_0 : i32, i32
  }
  func.func @transform_3(%arg0: i32) -> (i32, i32) {
    %c0_i32 = arith.constant 0 : i32
    %c0_i32_0 = arith.constant 0 : i32
    %c0_i32_1 = arith.constant 0 : i32
    return %c0_i32, %c0_i32_0 : i32, i32
  }
  func.func @transform_4(%arg0: i32) -> (i32, i32, i32) {
    %c0_i32 = arith.constant 0 : i32
    %c0_i32_0 = arith.constant 0 : i32
    %c0_i32_1 = arith.constant 0 : i32
    return %arg0, %c0_i32, %c0_i32_0 : i32, i32, i32
  }
}

</mosaic_0001>

<llo_original>
// kernel: merge_feature_tsm.1
$region0: #{merge_feature_tsm.1}
  #allocation0 [shape = 'u32[]', space=smem, size = 0x4, offset = 0x4, fixed_abs, tag = 'smem constant byte address 0x4 - core index']
  #allocation1 [shape = 'u32[144,128]{1,0:T(1,128)}', space=vmem, size = 0x12000, scoped, tag = 'internal scratch']
  %s0 = inlined_call_operand.vmem [shape: bf16[4,16,128], index: 0, kind: input, shape index: {}]
  %s1 = inlined_call_operand.vmem [shape: bf16[128,256], index: 1, kind: input, shape index: {}]
  %s2 = inlined_call_operand.vmem [shape: f32[1,256], index: 2, kind: input, shape index: {}]
  %s3 = inlined_call_operand.vmem [shape: bf16[16,169], index: 3, kind: input, shape index: {}]
  %s4 = inlined_call_operand.vmem [shape: f32[4,256,169], index: 4, kind: output, shape index: {}]
  %s5 = sld [smem:[#allocation0]]
  $region49: #{merge_feature_tsm.1} parent=0
    _
  %s7 = ssub.s32 1, %s5
  %s8 = scalar_select 0, %s7, %s5
  loop: start=0, step=1, limit=4
  $region2: #{merge_feature_tsm.1} parent=0 // loop_pre_header
    _
  $region3: #{merge_feature_tsm.1} parent=0 // loop_header
    %s10 = sphi 0, %s14
    %p11 = scmp.ge.s32.totalorder %s10, 4
    %s20 = sphi 0, %s22
    %s23 = sphi 0, %s20
    %s24 = sphi 0, %s23
    %s40 = sphi 0, %s24
    %s44 = sphi 0, %s44
    %s46 = sphi 0, %s44
    %s47 = sphi 0, %s46
    %s61 = sphi 0, %s47
    %s65 = sphi 0, %s65
    %s67 = sphi 0, %s65
    %s68 = sphi 0, %s67
    %s82 = sphi 0, %s68
    %s86 = sphi 0, %s86
    %s88 = sphi 0, %s86
    %s89 = sphi 0, %s88
    %s103 = sphi 0, %s89
    %s109 = sphi 0, %s111
    %s112 = sphi 0, %s109
    %s113 = sphi 0, %s112
    %s129 = sphi 0, %s113
  $region4: #{merge_feature_tsm.1} parent=0 // loop_header_branch
    %13 = sbr.rel (%p11) target = $region8
  $region5: #{merge_feature_tsm.1} parent=0 // loop_body
    %s15 = ssub.s32 %s10, 1
    %s16 = ssub.s32 %s10, 2
    %s17 = sadd.s32 %s10, 1
    %s18 = ssub.s32 %s10, %s17
    %p19 = scmp.eq.s32.totalorder %s18, 0
    %s21 = sadd.s32 %s20, 1
    %s22 = scalar_select %p19, %s20, %s21
    %p25 = pneg %p19
    %p26 = scmp.eq.s32.totalorder %s10, 1
    %p27 = por %p25, %p26
    %p28 = scmp.ne.s32.totalorder %s20, %s23
    %p29 = scmp.eq.s32.totalorder %s10, 0
    %p30 = por %p28, %p29
    %p31 = scmp.ne.s32.totalorder %s20, %s23
    %p32 = scmp.eq.s32.totalorder %s15, 1
    %p33 = por %p31, %p32
    %p34 = scmp.ne.s32.totalorder %s23, %s24
    %p35 = scmp.eq.s32.totalorder %s15, 0
    %p36 = por %p34, %p35
    %p37 = scmp.ne.s32.totalorder %s23, %s24
    %p38 = scmp.eq.s32.totalorder %s16, 1
    %p39 = por %p37, %p38
    %p41 = scmp.ne.s32.totalorder %s24, %s40
    %p42 = scmp.eq.s32.totalorder %s16, 0
    %p43 = por %p41, %p42
    %s45 = sadd.s32 %s44, 1
    %p48 = scmp.eq.s32.totalorder %s10, 1
    %p49 = scmp.ne.s32.totalorder %s44, %s46
    %p50 = scmp.eq.s32.totalorder %s10, 0
    %p51 = por %p49, %p50
    %p52 = scmp.ne.s32.totalorder %s44, %s46
    %p53 = scmp.eq.s32.totalorder %s15, 1
    %p54 = por %p52, %p53
    %p55 = scmp.ne.s32.totalorder %s46, %s47
    %p56 = scmp.eq.s32.totalorder %s15, 0
    %p57 = por %p55, %p56
    %p58 = scmp.ne.s32.totalorder %s46, %s47
    %p59 = scmp.eq.s32.totalorder %s16, 1
    %p60 = por %p58, %p59
    %p62 = scmp.ne.s32.totalorder %s47, %s61
    %p63 = scmp.eq.s32.totalorder %s16, 0
    %p64 = por %p62, %p63
    %s66 = sadd.s32 %s65, 1
    %p69 = scmp.eq.s32.totalorder %s10, 1
    %p70 = scmp.ne.s32.totalorder %s65, %s67
    %p71 = scmp.eq.s32.totalorder %s10, 0
    %p72 = por %p70, %p71
    %p73 = scmp.ne.s32.totalorder %s65, %s67
    %p74 = scmp.eq.s32.totalorder %s15, 1
    %p75 = por %p73, %p74
    %p76 = scmp.ne.s32.totalorder %s67, %s68
    %p77 = scmp.eq.s32.totalorder %s15, 0
    %p78 = por %p76, %p77
    %p79 = scmp.ne.s32.totalorder %s67, %s68
    %p80 = scmp.eq.s32.totalorder %s16, 1
    %p81 = por %p79, %p80
    %p83 = scmp.ne.s32.totalorder %s68, %s82
    %p84 = scmp.eq.s32.totalorder %s16, 0
    %p85 = por %p83, %p84
    %s87 = sadd.s32 %s86, 1
    %p90 = scmp.eq.s32.totalorder %s10, 1
    %p91 = scmp.ne.s32.totalorder %s86, %s88
    %p92 = scmp.eq.s32.totalorder %s10, 0
    %p93 = por %p91, %p92
    %p94 = scmp.ne.s32.totalorder %s86, %s88
    %p95 = scmp.eq.s32.totalorder %s15, 1
    %p96 = por %p94, %p95
    %p97 = scmp.ne.s32.totalorder %s88, %s89
    %p98 = scmp.eq.s32.totalorder %s15, 0
    %p99 = por %p97, %p98
    %p100 = scmp.ne.s32.totalorder %s88, %s89
    %p101 = scmp.eq.s32.totalorder %s16, 1
    %p102 = por %p100, %p101
    %p104 = scmp.ne.s32.totalorder %s89, %s103
    %p105 = scmp.eq.s32.totalorder %s16, 0
    %p106 = por %p104, %p105
    %s107 = ssub.s32 %s10, %s17
    %p108 = scmp.eq.s32.totalorder %s107, 0
    %s110 = sadd.s32 %s109, 1
    %s111 = scalar_select %p108, %s109, %s110
    %p114 = pneg %p108
    %p115 = scmp.eq.s32.totalorder %s10, 1
    %p116 = por %p114, %p115
    %p117 = scmp.ne.s32.totalorder %s109, %s112
    %p118 = scmp.eq.s32.totalorder %s10, 0
    %p119 = por %p117, %p118
    %p120 = scmp.ne.s32.totalorder %s109, %s112
    %p121 = scmp.eq.s32.totalorder %s15, 1
    %p122 = por %p120, %p121
    %p123 = scmp.ne.s32.totalorder %s112, %s113
    %p124 = scmp.eq.s32.totalorder %s15, 0
    %p125 = por %p123, %p124
    %p126 = scmp.ne.s32.totalorder %s112, %s113
    %p127 = scmp.eq.s32.totalorder %s16, 1
    %p128 = por %p126, %p127
    %p130 = scmp.ne.s32.totalorder %s113, %s129
    %p131 = scmp.eq.s32.totalorder %s16, 0
    %p132 = por %p130, %p131
    %p133 = scmp.le.s32.totalorder 1, %s10
    %p134 = scmp.lt.s32.totalorder %s10, 3
    %p135 = pnand %p133, %p134
    %p136 = pneg %p135
    // Predicated region
    $region9: #{merge_feature_tsm.1} parent=5 // pred_check
      _
    $region10: #{merge_feature_tsm.1} parent=5 // pred_check_branch
      %138 = sbr.rel (%p135) target = $region12
    $region11: #{merge_feature_tsm.1} parent=5 // pred_region
      %s139 = ssub.s32 %s10, 1
      // Predicated region
      $region13: #{merge_feature_tsm.1} parent=11 // pred_check
        %p140 = pneg %p57
      $region14: #{merge_feature_tsm.1} parent=11 // pred_check_branch
        %142 = sbr.rel (%p140) target = $region16
      $region15: #{merge_feature_tsm.1} parent=11 // pred_region
        _
      $region16: #{merge_feature_tsm.1} parent=11 // pred_fallthru
        _
      // Predicated region
      $region17: #{merge_feature_tsm.1} parent=11 // pred_check
        %p143 = pneg %p78
      $region18: #{merge_feature_tsm.1} parent=11 // pred_check_branch
        %145 = sbr.rel (%p143) target = $region20
      $region19: #{merge_feature_tsm.1} parent=11 // pred_region
        _
      $region20: #{merge_feature_tsm.1} parent=11 // pred_fallthru
        _
      // Predicated region
      $region21: #{merge_feature_tsm.1} parent=11 // pred_check
        %p146 = pneg %p99
      $region22: #{merge_feature_tsm.1} parent=11 // pred_check_branch
        %148 = sbr.rel (%p146) target = $region24
      $region23: #{merge_feature_tsm.1} parent=11 // pred_region
        _
      $region24: #{merge_feature_tsm.1} parent=11 // pred_fallthru
        _
    $region12: #{merge_feature_tsm.1} parent=5 // pred_fallthru
      _
    %p149 = scmp.lt.s32.totalorder %s10, 2
    // Predicated region
    $region25: #{merge_feature_tsm.1} parent=5 // pred_check
      %p150 = pneg %p149
    $region26: #{merge_feature_tsm.1} parent=5 // pred_check_branch
      %152 = sbr.rel (%p150) target = $region28
    $region27: #{merge_feature_tsm.1} parent=5 // pred_region
      // Predicated region
      $region29: #{merge_feature_tsm.1} parent=27 // pred_check
        %p153 = pneg %p30
      $region30: #{merge_feature_tsm.1} parent=27 // pred_check_branch
        %155 = sbr.rel (%p153) target = $region32
      $region31: #{merge_feature_tsm.1} parent=27 // pred_region
        %s156 = smul.u32 2, %s10
        %p157 = scmp.lt.s32.totalorder %s156, 3
        %s158 = scalar_select %p157, %s156, 3
        %s159 = smul.addr %s158, 2
        %s160 = smul.addr %s159, 4
        %s161 = scalar_lea.vmem %s0, %s160
        %s162 = smul.u32 2, %s10
      $region32: #{merge_feature_tsm.1} parent=27 // pred_fallthru
        _
    $region28: #{merge_feature_tsm.1} parent=5 // pred_fallthru
      _
    %p163 = scmp.le.s32.totalorder 1, %s10
    %p164 = scmp.lt.s32.totalorder %s10, 3
    %p165 = pnand %p163, %p164
    %p166 = pneg %p165
    // Predicated region
    $region33: #{merge_feature_tsm.1} parent=5 // pred_check
      _
    $region34: #{merge_feature_tsm.1} parent=5 // pred_check_branch
      %168 = sbr.rel (%p165) target = $region36
    $region35: #{merge_feature_tsm.1} parent=5 // pred_region
      %s169 = ssub.s32 %s10, 1
      %s170 = smul.u32 2, %s15
      %p171 = scmp.lt.s32.totalorder %s170, 3
      %s172 = scalar_select %p171, %s170, 3
      %s173 = smul.addr %s172, 2
      %s174 = smul.addr %s173, 4
      %s175 = scalar_lea.vmem %s0, %s174
      %p176 = pneg %p36
      %p177 = pneg %p33
      %p178 = pneg %p57
      %p179 = pneg %p54
      %p180 = pneg %p78
      %p181 = pneg %p75
      %p182 = pneg %p99
      %p183 = pneg %p96
      %p184 = pneg %p125
      %p185 = pneg %p122
      %s186 = smul.u32 2, %s15
      %p187 = scmp.lt.s32.totalorder %s186, 3
      %s188 = scalar_select %p187, %s186, 3
      %s189 = smul.addr %s188, 64
      %s190 = smul.addr %s189, 8
      %s191 = scalar_lea.vmem %s4, %s190
      %s192 = smul.u32 2, %s15
      %p193 = scmp.lt.s32.totalorder %s192, 3
      %s194 = scalar_select %p193, %s192, 3
      %s195 = smul.addr %s194, 2
      %s196 = smul.addr %s195, 4
      %s197 = scalar_lea.vmem %s0, %s196
      %s198 = smul.u32 2, %s15
      %s199 = smul.u32 2, %s15
      %p200 = scmp.lt.s32.totalorder %s199, 3
      %s201 = scalar_select %p200, %s199, 3
      %s202 = smul.addr %s201, 64
      %s203 = smul.addr %s202, 8
      %s204 = scalar_lea.vmem %s4, %s203
      %s205 = smul.u32 2, %s15
      %v207 = vld [vmem:[%s197] sm:$0xf]
      %v208 = vld [vmem:[%s197 + $0x4] sm:$0xf]
      %v209 = vld [vmem:[%s197 + $0x8] sm:$0xf]
      %v210 = vld [vmem:[%s197 + $0xc] sm:$0xf]
      %v211 = vld [vmem:[%s1] sm:$0xff]
      %v212 = vld [vmem:[%s1 + $0x8] sm:$0xff]
      %v213 = vld [vmem:[%s1 + $0x10] sm:$0xff]
      %v214 = vld [vmem:[%s1 + $0x18] sm:$0xff]
      %v215 = vld [vmem:[%s1 + $0x20] sm:$0xff]
      %v216 = vld [vmem:[%s1 + $0x28] sm:$0xff]
      %v217 = vld [vmem:[%s1 + $0x30] sm:$0xff]
      %v218 = vld [vmem:[%s1 + $0x38] sm:$0xff]
      %v219 = vld [vmem:[%s1 + $0x40] sm:$0xff]
      %v220 = vld [vmem:[%s1 + $0x48] sm:$0xff]
      %v221 = vld [vmem:[%s1 + $0x50] sm:$0xff]
      %v222 = vld [vmem:[%s1 + $0x58] sm:$0xff]
      %v223 = vld [vmem:[%s1 + $0x60] sm:$0xff]
      %v224 = vld [vmem:[%s1 + $0x68] sm:$0xff]
      %v225 = vld [vmem:[%s1 + $0x70] sm:$0xff]
      %v226 = vld [vmem:[%s1 + $0x78] sm:$0xff]
      %v227 = vld [vmem:[%s2] sm:$0x3]
      %v229 = vlaneseq
      %v230 = vshrl.u32 %v229, 7
      %v231 = vsub.s32 0, %v230
      %v232 = vrot.slane %v227, %v231
      %v233 = vlaneseq
      %v234 = vshrl.u32 %v233, 7
      %v235 = vsub.s32 1, %v234
      %v236 = vrot.slane %v227, %v235
      %v243 = vunpack.c.l.b16 %v207
      %v244 = vunpack.c.l.b16 %v208
      %v245 = vunpack.c.l.b16 %v209
      %v246 = vunpack.c.l.b16 %v210
      %v247 = vpack.c.b16 %v244, %v243
      %v248 = vpack.c.b16 %v246, %v245
      %v267 = vunpack.c.l.b16 %v211
      %v268 = vunpack.c.h.b16 %v211
      %v269 = vunpack.c.l.b16 %v212
      %v270 = vunpack.c.h.b16 %v212
      %v271 = vunpack.c.l.b16 %v213
      %v272 = vunpack.c.h.b16 %v213
      %v273 = vunpack.c.l.b16 %v214
      %v274 = vunpack.c.h.b16 %v214
      %v275 = vunpack.c.l.b16 %v215
      %v276 = vunpack.c.h.b16 %v215
      %v277 = vunpack.c.l.b16 %v216
      %v278 = vunpack.c.h.b16 %v216
      %v279 = vunpack.c.l.b16 %v217
      %v280 = vunpack.c.h.b16 %v217
      %v281 = vunpack.c.l.b16 %v218
      %v282 = vunpack.c.h.b16 %v218
      %v283 = vunpack.c.l.b16 %v219
      %v284 = vunpack.c.h.b16 %v219
      %v285 = vunpack.c.l.b16 %v220
      %v286 = vunpack.c.h.b16 %v220
      %v287 = vunpack.c.l.b16 %v221
      %v288 = vunpack.c.h.b16 %v221
      %v289 = vunpack.c.l.b16 %v222
      %v290 = vunpack.c.h.b16 %v222
      %v291 = vunpack.c.l.b16 %v223
      %v292 = vunpack.c.h.b16 %v223
      %v293 = vunpack.c.l.b16 %v224
      %v294 = vunpack.c.h.b16 %v224
      %v295 = vunpack.c.l.b16 %v225
      %v296 = vunpack.c.h.b16 %v225
      %v297 = vunpack.c.l.b16 %v226
      %v298 = vunpack.c.h.b16 %v226
      %v299 = vpack.c.b16 %v269, %v267
      %v300 = vpack.c.b16 %v270, %v268
      %v301 = vpack.c.b16 %v273, %v271
      %v302 = vpack.c.b16 %v274, %v272
      %v303 = vpack.c.b16 %v277, %v275
      %v304 = vpack.c.b16 %v278, %v276
      %v305 = vpack.c.b16 %v281, %v279
      %v306 = vpack.c.b16 %v282, %v280
      %v307 = vpack.c.b16 %v285, %v283
      %v308 = vpack.c.b16 %v286, %v284
      %v309 = vpack.c.b16 %v289, %v287
      %v310 = vpack.c.b16 %v290, %v288
      %v311 = vpack.c.b16 %v293, %v291
      %v312 = vpack.c.b16 %v294, %v292
      %v313 = vpack.c.b16 %v297, %v295
      %v314 = vpack.c.b16 %v298, %v296
      %331 = vmatprep.subr.bf16.mxu0 %v300
      %332 = vmatpush1.bf16.msra.mxu0 %v299
      %333 = vmatprep.subr.bf16.mxu0 %v302
      %334 = vmatpush1.bf16.msra.mxu0 %v301
      %335 = vmatprep.subr.bf16.mxu0 %v304
      %336 = vmatpush1.bf16.msra.mxu0 %v303
      %337 = vmatprep.subr.bf16.mxu0 %v306
      %338 = vmatpush1.bf16.msra.mxu0 %v305
      %339 = vmatprep.subr.bf16.mxu0 %v308
      %340 = vmatpush1.bf16.msra.mxu0 %v307
      %341 = vmatprep.subr.bf16.mxu0 %v310
      %342 = vmatpush1.bf16.msra.mxu0 %v309
      %343 = vmatprep.subr.bf16.mxu0 %v312
      %344 = vmatpush1.bf16.msra.mxu0 %v311
      %345 = vmatprep.subr.bf16.mxu0 %v314
      %346 = vmatpush1.bf16.msra.mxu0 %v313
      %347 = vmatprep.subr.bf16.mxu0 0
      %348 = vmatpush1.bf16.msra.mxu0 0
      %349 = vmatprep.subr.bf16.mxu0 0
      %350 = vmatpush1.bf16.msra.mxu0 0
      %351 = vmatprep.subr.bf16.mxu0 0
      %352 = vmatpush1.bf16.msra.mxu0 0
      %353 = vmatprep.subr.bf16.mxu0 0
      %354 = vmatpush1.bf16.msra.mxu0 0
      %355 = vmatprep.subr.bf16.mxu0 0
      %356 = vmatpush1.bf16.msra.mxu0 0
      %357 = vmatprep.subr.bf16.mxu0 0
      %358 = vmatpush1.bf16.msra.mxu0 0
      %359 = vmatprep.subr.bf16.mxu0 0
      %360 = vmatpush1.bf16.msra.mxu0 0
      %361 = vmatprep.subr.bf16.mxu0 0
      %362 = vmatpush1.bf16.msra.mxu0 0
      %363 = vmatprep.mubr.bf16.mxu0 0
      %364 = vmatmul.mubr.bf16.gmra.mrb[0].mxu0 %v247
      %v365 = vpop.f32.mrb[0].mxu0
      %v366 = vadd.f32 %v232, %v365
      %v367 = vpop.f32.mrb[0].mxu0
      %v368 = vadd.f32 %v236, %v367
      %v369 = vpop.f32.mrb[0].mxu0
      %v370 = vadd.f32 %v232, %v369
      %v371 = vpop.f32.mrb[0].mxu0
      %v372 = vadd.f32 %v236, %v371
      %373 = vmatprep.mubr.bf16.mxu0 0
      %374 = vmatmul.mubr.bf16.gmra.mrb[0].mxu0 %v248
      %v375 = vpop.f32.mrb[0].mxu0
      %v376 = vadd.f32 %v232, %v375
      %v377 = vpop.f32.mrb[0].mxu0
      %v378 = vadd.f32 %v236, %v377
      %v379 = vpop.f32.mrb[0].mxu0
      %v380 = vadd.f32 %v232, %v379
      %v381 = vpop.f32.mrb[0].mxu0
      %v382 = vadd.f32 %v236, %v381
      %383 = vdwg.mxu0
      %384 = vxpose.xlu0.b32.start [1/16] %v366, 128
      %385 = vxpose.xlu0.b32.cont [2/16] %v370, 128
      %386 = vxpose.xlu0.b32.cont [3/16] 0.0, 128
      %387 = vxpose.xlu0.b32.cont [4/16] 0.0, 128
      %388 = vxpose.xlu0.b32.cont [5/16] 0.0, 128
      %389 = vxpose.xlu0.b32.cont [6/16] 0.0, 128
      %390 = vxpose.xlu0.b32.cont [7/16] 0.0, 128
      %391 = vxpose.xlu0.b32.cont [8/16] 0.0, 128
      %392 = vxpose.xlu0.b32.cont [9/16] 0.0, 128
      %393 = vxpose.xlu0.b32.cont [10/16] 0.0, 128
      %394 = vxpose.xlu0.b32.cont [11/16] 0.0, 128
      %395 = vxpose.xlu0.b32.cont [12/16] 0.0, 128
      %396 = vxpose.xlu0.b32.cont [13/16] 0.0, 128
      %397 = vxpose.xlu0.b32.cont [14/16] 0.0, 128
      %398 = vxpose.xlu0.b32.cont [15/16] 0.0, 128
      %399 = vxpose.xlu0.b32.end [16/16] 0.0, 128
      %v400 = vpop.trf.xlu0
      %v401 = vpop.trf.xlu0
      %v402 = vpop.trf.xlu0
      %v403 = vpop.trf.xlu0
      %v404 = vpop.trf.xlu0
      %v405 = vpop.trf.xlu0
      %v406 = vpop.trf.xlu0
      %v407 = vpop.trf.xlu0
      %v408 = vpop.trf.xlu0
      %v409 = vpop.trf.xlu0
      %v410 = vpop.trf.xlu0
      %v411 = vpop.trf.xlu0
      %v412 = vpop.trf.xlu0
      %v413 = vpop.trf.xlu0
      %v414 = vpop.trf.xlu0
      %v415 = vpop.trf.xlu0
      %416 = vxpose.xlu0.b32.start [1/16] %v368, 128
      %417 = vxpose.xlu0.b32.cont [2/16] %v372, 128
      %418 = vxpose.xlu0.b32.cont [3/16] 0.0, 128
      %419 = vxpose.xlu0.b32.cont [4/16] 0.0, 128
      %420 = vxpose.xlu0.b32.cont [5/16] 0.0, 128
      %421 = vxpose.xlu0.b32.cont [6/16] 0.0, 128
      %422 = vxpose.xlu0.b32.cont [7/16] 0.0, 128
      %423 = vxpose.xlu0.b32.cont [8/16] 0.0, 128
      %424 = vxpose.xlu0.b32.cont [9/16] 0.0, 128
      %425 = vxpose.xlu0.b32.cont [10/16] 0.0, 128
      %426 = vxpose.xlu0.b32.cont [11/16] 0.0, 128
      %427 = vxpose.xlu0.b32.cont [12/16] 0.0, 128
      %428 = vxpose.xlu0.b32.cont [13/16] 0.0, 128
      %429 = vxpose.xlu0.b32.cont [14/16] 0.0, 128
      %430 = vxpose.xlu0.b32.cont [15/16] 0.0, 128
      %431 = vxpose.xlu0.b32.end [16/16] 0.0, 128
      %v432 = vpop.trf.xlu0
      %v433 = vpop.trf.xlu0
      %v434 = vpop.trf.xlu0
      %v435 = vpop.trf.xlu0
      %v436 = vpop.trf.xlu0
      %v437 = vpop.trf.xlu0
      %v438 = vpop.trf.xlu0
      %v439 = vpop.trf.xlu0
      %v440 = vpop.trf.xlu0
      %v441 = vpop.trf.xlu0
      %v442 = vpop.trf.xlu0
      %v443 = vpop.trf.xlu0
      %v444 = vpop.trf.xlu0
      %v445 = vpop.trf.xlu0
      %v446 = vpop.trf.xlu0
      %v447 = vpop.trf.xlu0
      %448 = vxpose.xlu0.b32.start [1/16] %v376, 128
      %449 = vxpose.xlu0.b32.cont [2/16] %v380, 128
      %450 = vxpose.xlu0.b32.cont [3/16] 0.0, 128
      %451 = vxpose.xlu0.b32.cont [4/16] 0.0, 128
      %452 = vxpose.xlu0.b32.cont [5/16] 0.0, 128
      %453 = vxpose.xlu0.b32.cont [6/16] 0.0, 128
      %454 = vxpose.xlu0.b32.cont [7/16] 0.0, 128
      %455 = vxpose.xlu0.b32.cont [8/16] 0.0, 128
      %456 = vxpose.xlu0.b32.cont [9/16] 0.0, 128
      %457 = vxpose.xlu0.b32.cont [10/16] 0.0, 128
      %458 = vxpose.xlu0.b32.cont [11/16] 0.0, 128
      %459 = vxpose.xlu0.b32.cont [12/16] 0.0, 128
      %460 = vxpose.xlu0.b32.cont [13/16] 0.0, 128
      %461 = vxpose.xlu0.b32.cont [14/16] 0.0, 128
      %462 = vxpose.xlu0.b32.cont [15/16] 0.0, 128
      %463 = vxpose.xlu0.b32.end [16/16] 0.0, 128
      %v464 = vpop.trf.xlu0
      %v465 = vpop.trf.xlu0
      %v466 = vpop.trf.xlu0
      %v467 = vpop.trf.xlu0
      %v468 = vpop.trf.xlu0
      %v469 = vpop.trf.xlu0
      %v470 = vpop.trf.xlu0
      %v471 = vpop.trf.xlu0
      %v472 = vpop.trf.xlu0
      %v473 = vpop.trf.xlu0
      %v474 = vpop.trf.xlu0
      %v475 = vpop.trf.xlu0
      %v476 = vpop.trf.xlu0
      %v477 = vpop.trf.xlu0
      %v478 = vpop.trf.xlu0
      %v479 = vpop.trf.xlu0
      %480 = vxpose.xlu0.b32.start [1/16] %v378, 128
      %481 = vxpose.xlu0.b32.cont [2/16] %v382, 128
      %482 = vxpose.xlu0.b32.cont [3/16] 0.0, 128
      %483 = vxpose.xlu0.b32.cont [4/16] 0.0, 128
      %484 = vxpose.xlu0.b32.cont [5/16] 0.0, 128
      %485 = vxpose.xlu0.b32.cont [6/16] 0.0, 128
      %486 = vxpose.xlu0.b32.cont [7/16] 0.0, 128
      %487 = vxpose.xlu0.b32.cont [8/16] 0.0, 128
      %488 = vxpose.xlu0.b32.cont [9/16] 0.0, 128
      %489 = vxpose.xlu0.b32.cont [10/16] 0.0, 128
      %490 = vxpose.xlu0.b32.cont [11/16] 0.0, 128
      %491 = vxpose.xlu0.b32.cont [12/16] 0.0, 128
      %492 = vxpose.xlu0.b32.cont [13/16] 0.0, 128
      %493 = vxpose.xlu0.b32.cont [14/16] 0.0, 128
      %494 = vxpose.xlu0.b32.cont [15/16] 0.0, 128
      %495 = vxpose.xlu0.b32.end [16/16] 0.0, 128
      %v496 = vpop.trf.xlu0
      %v497 = vpop.trf.xlu0
      %v498 = vpop.trf.xlu0
      %v499 = vpop.trf.xlu0
      %v500 = vpop.trf.xlu0
      %v501 = vpop.trf.xlu0
      %v502 = vpop.trf.xlu0
      %v503 = vpop.trf.xlu0
      %v504 = vpop.trf.xlu0
      %v505 = vpop.trf.xlu0
      %v506 = vpop.trf.xlu0
      %v507 = vpop.trf.xlu0
      %v508 = vpop.trf.xlu0
      %v509 = vpop.trf.xlu0
      %v510 = vpop.trf.xlu0
      %v511 = vpop.trf.xlu0
      %v512 = vpack.c.bf16 %v401, %v400
      %v513 = vpack.c.bf16 %v403, %v402
      %v514 = vpack.c.bf16 %v405, %v404
      %v515 = vpack.c.bf16 %v407, %v406
      %v516 = vpack.c.bf16 %v409, %v408
      %v517 = vpack.c.bf16 %v411, %v410
      %v518 = vpack.c.bf16 %v413, %v412
      %v519 = vpack.c.bf16 %v415, %v414
      %v520 = vpack.c.bf16 %v433, %v432
      %v521 = vpack.c.bf16 %v435, %v434
      %v522 = vpack.c.bf16 %v437, %v436
      %v523 = vpack.c.bf16 %v439, %v438
      %v524 = vpack.c.bf16 %v441, %v440
      %v525 = vpack.c.bf16 %v443, %v442
      %v526 = vpack.c.bf16 %v445, %v444
      %v527 = vpack.c.bf16 %v447, %v446
      %v528 = vpack.c.bf16 %v465, %v464
      %v529 = vpack.c.bf16 %v467, %v466
      %v530 = vpack.c.bf16 %v469, %v468
      %v531 = vpack.c.bf16 %v471, %v470
      %v532 = vpack.c.bf16 %v473, %v472
      %v533 = vpack.c.bf16 %v475, %v474
      %v534 = vpack.c.bf16 %v477, %v476
      %v535 = vpack.c.bf16 %v479, %v478
      %v536 = vpack.c.bf16 %v497, %v496
      %v537 = vpack.c.bf16 %v499, %v498
      %v538 = vpack.c.bf16 %v501, %v500
      %v539 = vpack.c.bf16 %v503, %v502
      %v540 = vpack.c.bf16 %v505, %v504
      %v541 = vpack.c.bf16 %v507, %v506
      %v542 = vpack.c.bf16 %v509, %v508
      %v543 = vpack.c.bf16 %v511, %v510
      %v544 = vld [vmem:[%s3] sm:$0xff]
      %v545 = vld [vmem:[%s3 + $0x8] sm:$0xff]
      %v548 = vunpack.c.l.b16 %v544
      %v549 = vunpack.c.h.b16 %v544
      %v550 = vunpack.c.l.b16 %v545
      %v551 = vunpack.c.h.b16 %v545
      %v552 = vpack.c.b16 %v550, %v548
      %v553 = vpack.c.b16 %v551, %v549
      %vm556 = vcmask 130048
      %v558 = vsel %vm556, %v512, 0
      %v561 = vsel %vm556, %v513, 0
      %v564 = vsel %vm556, %v514, 0
      %v567 = vsel %vm556, %v515, 0
      %v570 = vsel %vm556, %v516, 0
      %v573 = vsel %vm556, %v517, 0
      %v576 = vsel %vm556, %v518, 0
      %v579 = vsel %vm556, %v519, 0
      %v582 = vsel %vm556, %v520, 0
      %v585 = vsel %vm556, %v521, 0
      %v588 = vsel %vm556, %v522, 0
      %v591 = vsel %vm556, %v523, 0
      %v594 = vsel %vm556, %v524, 0
      %v597 = vsel %vm556, %v525, 0
      %v600 = vsel %vm556, %v526, 0
      %v603 = vsel %vm556, %v527, 0
      %v606 = vsel %vm556, %v528, 0
      %v609 = vsel %vm556, %v529, 0
      %v612 = vsel %vm556, %v530, 0
      %v615 = vsel %vm556, %v531, 0
      %v618 = vsel %vm556, %v532, 0
      %v621 = vsel %vm556, %v533, 0
      %v624 = vsel %vm556, %v534, 0
      %v627 = vsel %vm556, %v535, 0
      %v630 = vsel %vm556, %v536, 0
      %v633 = vsel %vm556, %v537, 0
      %v636 = vsel %vm556, %v538, 0
      %v639 = vsel %vm556, %v539, 0
      %v642 = vsel %vm556, %v540, 0
      %v645 = vsel %vm556, %v541, 0
      %v648 = vsel %vm556, %v542, 0
      %v651 = vsel %vm556, %v543, 0
      %653 = vmatprep.subr.bf16.mxu0 %v553
      %654 = vmatpush1.bf16.msra.mxu0 %v552
      %655 = vmatprep.subr.bf16.mxu0 0
      %656 = vmatpush1.bf16.msra.mxu0 0
      %657 = vmatprep.subr.bf16.mxu0 0
      %658 = vmatpush1.bf16.msra.mxu0 0
      %659 = vmatprep.subr.bf16.mxu0 0
      %660 = vmatpush1.bf16.msra.mxu0 0
      %661 = vmatprep.subr.bf16.mxu0 0
      %662 = vmatpush1.bf16.msra.mxu0 0
      %663 = vmatprep.subr.bf16.mxu0 0
      %664 = vmatpush1.bf16.msra.mxu0 0
      %665 = vmatprep.subr.bf16.mxu0 0
      %666 = vmatpush1.bf16.msra.mxu0 0
      %667 = vmatprep.subr.bf16.mxu0 0
      %668 = vmatpush1.bf16.msra.mxu0 0
      %669 = vmatprep.subr.bf16.mxu0 0
      %670 = vmatpush1.bf16.msra.mxu0 0
      %671 = vmatprep.subr.bf16.mxu0 0
      %672 = vmatpush1.bf16.msra.mxu0 0
      %673 = vmatprep.subr.bf16.mxu0 0
      %674 = vmatpush1.bf16.msra.mxu0 0
      %675 = vmatprep.subr.bf16.mxu0 0
      %676 = vmatpush1.bf16.msra.mxu0 0
      %677 = vmatprep.subr.bf16.mxu0 0
      %678 = vmatpush1.bf16.msra.mxu0 0
      %679 = vmatprep.subr.bf16.mxu0 0
      %680 = vmatpush1.bf16.msra.mxu0 0
      %681 = vmatprep.subr.bf16.mxu0 0
      %682 = vmatpush1.bf16.msra.mxu0 0
      %683 = vmatprep.subr.bf16.mxu0 0
      %684 = vmatpush1.bf16.msra.mxu0 0
      %685 = vmatprep.mubr.bf16.mxu0 0
      %686 = vmatmul.mubr.bf16.gmra.mrb[0].mxu0 %v558
      %v687 = vpop.f32.mrb[0].mxu0
      %v688 = vadd.f32 0.0, %v687
      %v689 = vpop.f32.mrb[0].mxu0
      %v690 = vadd.f32 0.0, %v689
      %v691 = vpop.f32.mrb[0].mxu0
      %v692 = vadd.f32 0.0, %v691
      %v693 = vpop.f32.mrb[0].mxu0
      %v694 = vadd.f32 0.0, %v693
      %695 = vmatprep.mubr.bf16.mxu0 0
      %696 = vmatmul.mubr.bf16.gmra.mrb[0].mxu0 %v561
      %v697 = vpop.f32.mrb[0].mxu0
      %v698 = vadd.f32 0.0, %v697
      %v699 = vpop.f32.mrb[0].mxu0
      %v700 = vadd.f32 0.0, %v699
      %v701 = vpop.f32.mrb[0].mxu0
      %v702 = vadd.f32 0.0, %v701
      %v703 = vpop.f32.mrb[0].mxu0
      %v704 = vadd.f32 0.0, %v703
      %705 = vmatprep.mubr.bf16.mxu0 0
      %706 = vmatmul.mubr.bf16.gmra.mrb[0].mxu0 %v564
      %v707 = vpop.f32.mrb[0].mxu0
      %v708 = vadd.f32 0.0, %v707
      %v709 = vpop.f32.mrb[0].mxu0
      %v710 = vadd.f32 0.0, %v709
      %v711 = vpop.f32.mrb[0].mxu0
      %v712 = vadd.f32 0.0, %v711
      %v713 = vpop.f32.mrb[0].mxu0
      %v714 = vadd.f32 0.0, %v713
      %715 = vmatprep.mubr.bf16.mxu0 0
      %716 = vmatmul.mubr.bf16.gmra.mrb[0].mxu0 %v567
      %v717 = vpop.f32.mrb[0].mxu0
      %v718 = vadd.f32 0.0, %v717
      %v719 = vpop.f32.mrb[0].mxu0
      %v720 = vadd.f32 0.0, %v719
      %v721 = vpop.f32.mrb[0].mxu0
      %v722 = vadd.f32 0.0, %v721
      %v723 = vpop.f32.mrb[0].mxu0
      %v724 = vadd.f32 0.0, %v723
      %725 = vmatprep.mubr.bf16.mxu0 0
      %726 = vmatmul.mubr.bf16.gmra.mrb[0].mxu0 %v570
      %v727 = vpop.f32.mrb[0].mxu0
      %v728 = vadd.f32 0.0, %v727
      %v729 = vpop.f32.mrb[0].mxu0
      %v730 = vadd.f32 0.0, %v729
      %v731 = vpop.f32.mrb[0].mxu0
      %v732 = vadd.f32 0.0, %v731
      %v733 = vpop.f32.mrb[0].mxu0
      %v734 = vadd.f32 0.0, %v733
      %735 = vmatprep.mubr.bf16.mxu0 0
      %736 = vmatmul.mubr.bf16.gmra.mrb[0].mxu0 %v573
      %v737 = vpop.f32.mrb[0].mxu0
      %v738 = vadd.f32 0.0, %v737
      %v739 = vpop.f32.mrb[0].mxu0
      %v740 = vadd.f32 0.0, %v739
      %v741 = vpop.f32.mrb[0].mxu0
      %v742 = vadd.f32 0.0, %v741
      %v743 = vpop.f32.mrb[0].mxu0
      %v744 = vadd.f32 0.0, %v743
      %745 = vmatprep.mubr.bf16.mxu0 0
      %746 = vmatmul.mubr.bf16.gmra.mrb[0].mxu0 %v576
      %v747 = vpop.f32.mrb[0].mxu0
      %v748 = vadd.f32 0.0, %v747
      %v749 = vpop.f32.mrb[0].mxu0
      %v750 = vadd.f32 0.0, %v749
      %v751 = vpop.f32.mrb[0].mxu0
      %v752 = vadd.f32 0.0, %v751
      %v753 = vpop.f32.mrb[0].mxu0
      %v754 = vadd.f32 0.0, %v753
      %755 = vmatprep.mubr.bf16.mxu0 0
      %756 = vmatmul.mubr.bf16.gmra.mrb[0].mxu0 %v579
      %v757 = vpop.f32.mrb[0].mxu0
      %v758 = vadd.f32 0.0, %v757
      %v759 = vpop.f32.mrb[0].mxu0
      %v760 = vadd.f32 0.0, %v759
      %v761 = vpop.f32.mrb[0].mxu0
      %v762 = vadd.f32 0.0, %v761
      %v763 = vpop.f32.mrb[0].mxu0
      %v764 = vadd.f32 0.0, %v763
      %765 = vmatprep.mubr.bf16.mxu0 0
      %766 = vmatmul.mubr.bf16.gmra.mrb[0].mxu0 %v582
      %v767 = vpop.f32.mrb[0].mxu0
      %v768 = vadd.f32 0.0, %v767
      %v769 = vpop.f32.mrb[0].mxu0
      %v770 = vadd.f32 0.0, %v769
      %v771 = vpop.f32.mrb[0].mxu0
      %v772 = vadd.f32 0.0, %v771
      %v773 = vpop.f32.mrb[0].mxu0
      %v774 = vadd.f32 0.0, %v773
      %775 = vmatprep.mubr.bf16.mxu0 0
      %776 = vmatmul.mubr.bf16.gmra.mrb[0].mxu0 %v585
      %v777 = vpop.f32.mrb[0].mxu0
      %v778 = vadd.f32 0.0, %v777
      %v779 = vpop.f32.mrb[0].mxu0
      %v780 = vadd.f32 0.0, %v779
      %v781 = vpop.f32.mrb[0].mxu0
      %v782 = vadd.f32 0.0, %v781
      %v783 = vpop.f32.mrb[0].mxu0
      %v784 = vadd.f32 0.0, %v783
      %785 = vmatprep.mubr.bf16.mxu0 0
      %786 = vmatmul.mubr.bf16.gmra.mrb[0].mxu0 %v588
      %v787 = vpop.f32.mrb[0].mxu0
      %v788 = vadd.f32 0.0, %v787
      %v789 = vpop.f32.mrb[0].mxu0
      %v790 = vadd.f32 0.0, %v789
      %v791 = vpop.f32.mrb[0].mxu0
      %v792 = vadd.f32 0.0, %v791
      %v793 = vpop.f32.mrb[0].mxu0
      %v794 = vadd.f32 0.0, %v793
      %795 = vmatprep.mubr.bf16.mxu0 0
      %796 = vmatmul.mubr.bf16.gmra.mrb[0].mxu0 %v591
      %v797 = vpop.f32.mrb[0].mxu0
      %v798 = vadd.f32 0.0, %v797
      %v799 = vpop.f32.mrb[0].mxu0
      %v800 = vadd.f32 0.0, %v799
      %v801 = vpop.f32.mrb[0].mxu0
      %v802 = vadd.f32 0.0, %v801
      %v803 = vpop.f32.mrb[0].mxu0
      %v804 = vadd.f32 0.0, %v803
      %805 = vmatprep.mubr.bf16.mxu0 0
      %806 = vmatmul.mubr.bf16.gmra.mrb[0].mxu0 %v594
      %v807 = vpop.f32.mrb[0].mxu0
      %v808 = vadd.f32 0.0, %v807
      %v809 = vpop.f32.mrb[0].mxu0
      %v810 = vadd.f32 0.0, %v809
      %v811 = vpop.f32.mrb[0].mxu0
      %v812 = vadd.f32 0.0, %v811
      %v813 = vpop.f32.mrb[0].mxu0
      %v814 = vadd.f32 0.0, %v813
      %815 = vmatprep.mubr.bf16.mxu0 0
      %816 = vmatmul.mubr.bf16.gmra.mrb[0].mxu0 %v597
      %v817 = vpop.f32.mrb[0].mxu0
      %v818 = vadd.f32 0.0, %v817
      %v819 = vpop.f32.mrb[0].mxu0
      %v820 = vadd.f32 0.0, %v819
      %v821 = vpop.f32.mrb[0].mxu0
      %v822 = vadd.f32 0.0, %v821
      %v823 = vpop.f32.mrb[0].mxu0
      %v824 = vadd.f32 0.0, %v823
      %825 = vmatprep.mubr.bf16.mxu0 0
      %826 = vmatmul.mubr.bf16.gmra.mrb[0].mxu0 %v600
      %v827 = vpop.f32.mrb[0].mxu0
      %v828 = vadd.f32 0.0, %v827
      %v829 = vpop.f32.mrb[0].mxu0
      %v830 = vadd.f32 0.0, %v829
      %v831 = vpop.f32.mrb[0].mxu0
      %v832 = vadd.f32 0.0, %v831
      %v833 = vpop.f32.mrb[0].mxu0
      %v834 = vadd.f32 0.0, %v833
      %835 = vmatprep.mubr.bf16.mxu0 0
      %836 = vmatmul.mubr.bf16.gmra.mrb[0].mxu0 %v603
      %v837 = vpop.f32.mrb[0].mxu0
      %v838 = vadd.f32 0.0, %v837
      %v839 = vpop.f32.mrb[0].mxu0
      %v840 = vadd.f32 0.0, %v839
      %v841 = vpop.f32.mrb[0].mxu0
      %v842 = vadd.f32 0.0, %v841
      %v843 = vpop.f32.mrb[0].mxu0
      %v844 = vadd.f32 0.0, %v843
      %845 = vmatprep.mubr.bf16.mxu0 0
      %846 = vmatmul.mubr.bf16.gmra.mrb[0].mxu0 %v606
      %v847 = vpop.f32.mrb[0].mxu0
      %v848 = vadd.f32 0.0, %v847
      %v849 = vpop.f32.mrb[0].mxu0
      %v850 = vadd.f32 0.0, %v849
      %v851 = vpop.f32.mrb[0].mxu0
      %v852 = vadd.f32 0.0, %v851
      %v853 = vpop.f32.mrb[0].mxu0
      %v854 = vadd.f32 0.0, %v853
      %855 = vmatprep.mubr.bf16.mxu0 0
      %856 = vmatmul.mubr.bf16.gmra.mrb[0].mxu0 %v609
      %v857 = vpop.f32.mrb[0].mxu0
      %v858 = vadd.f32 0.0, %v857
      %v859 = vpop.f32.mrb[0].mxu0
      %v860 = vadd.f32 0.0, %v859
      %v861 = vpop.f32.mrb[0].mxu0
      %v862 = vadd.f32 0.0, %v861
      %v863 = vpop.f32.mrb[0].mxu0
      %v864 = vadd.f32 0.0, %v863
      %865 = vmatprep.mubr.bf16.mxu0 0
      %866 = vmatmul.mubr.bf16.gmra.mrb[0].mxu0 %v612
      %v867 = vpop.f32.mrb[0].mxu0
      %v868 = vadd.f32 0.0, %v867
      %v869 = vpop.f32.mrb[0].mxu0
      %v870 = vadd.f32 0.0, %v869
      %v871 = vpop.f32.mrb[0].mxu0
      %v872 = vadd.f32 0.0, %v871
      %v873 = vpop.f32.mrb[0].mxu0
      %v874 = vadd.f32 0.0, %v873
      %875 = vmatprep.mubr.bf16.mxu0 0
      %876 = vmatmul.mubr.bf16.gmra.mrb[0].mxu0 %v615
      %v877 = vpop.f32.mrb[0].mxu0
      %v878 = vadd.f32 0.0, %v877
      %v879 = vpop.f32.mrb[0].mxu0
      %v880 = vadd.f32 0.0, %v879
      %v881 = vpop.f32.mrb[0].mxu0
      %v882 = vadd.f32 0.0, %v881
      %v883 = vpop.f32.mrb[0].mxu0
      %v884 = vadd.f32 0.0, %v883
      %885 = vmatprep.mubr.bf16.mxu0 0
      %886 = vmatmul.mubr.bf16.gmra.mrb[0].mxu0 %v618
      %v887 = vpop.f32.mrb[0].mxu0
      %v888 = vadd.f32 0.0, %v887
      %v889 = vpop.f32.mrb[0].mxu0
      %v890 = vadd.f32 0.0, %v889
      %v891 = vpop.f32.mrb[0].mxu0
      %v892 = vadd.f32 0.0, %v891
      %v893 = vpop.f32.mrb[0].mxu0
      %v894 = vadd.f32 0.0, %v893
      %895 = vmatprep.mubr.bf16.mxu0 0
      %896 = vmatmul.mubr.bf16.gmra.mrb[0].mxu0 %v621
      %v897 = vpop.f32.mrb[0].mxu0
      %v898 = vadd.f32 0.0, %v897
      %v899 = vpop.f32.mrb[0].mxu0
      %v900 = vadd.f32 0.0, %v899
      %v901 = vpop.f32.mrb[0].mxu0
      %v902 = vadd.f32 0.0, %v901
      %v903 = vpop.f32.mrb[0].mxu0
      %v904 = vadd.f32 0.0, %v903
      %905 = vmatprep.mubr.bf16.mxu0 0
      %906 = vmatmul.mubr.bf16.gmra.mrb[0].mxu0 %v624
      %v907 = vpop.f32.mrb[0].mxu0
      %v908 = vadd.f32 0.0, %v907
      %v909 = vpop.f32.mrb[0].mxu0
      %v910 = vadd.f32 0.0, %v909
      %v911 = vpop.f32.mrb[0].mxu0
      %v912 = vadd.f32 0.0, %v911
      %v913 = vpop.f32.mrb[0].mxu0
      %v914 = vadd.f32 0.0, %v913
      %915 = vmatprep.mubr.bf16.mxu0 0
      %916 = vmatmul.mubr.bf16.gmra.mrb[0].mxu0 %v627
      %v917 = vpop.f32.mrb[0].mxu0
      %v918 = vadd.f32 0.0, %v917
      %v919 = vpop.f32.mrb[0].mxu0
      %v920 = vadd.f32 0.0, %v919
      %v921 = vpop.f32.mrb[0].mxu0
      %v922 = vadd.f32 0.0, %v921
      %v923 = vpop.f32.mrb[0].mxu0
      %v924 = vadd.f32 0.0, %v923
      %925 = vmatprep.mubr.bf16.mxu0 0
      %926 = vmatmul.mubr.bf16.gmra.mrb[0].mxu0 %v630
      %v927 = vpop.f32.mrb[0].mxu0
      %v928 = vadd.f32 0.0, %v927
      %v929 = vpop.f32.mrb[0].mxu0
      %v930 = vadd.f32 0.0, %v929
      %v931 = vpop.f32.mrb[0].mxu0
      %v932 = vadd.f32 0.0, %v931
      %v933 = vpop.f32.mrb[0].mxu0
      %v934 = vadd.f32 0.0, %v933
      %935 = vmatprep.mubr.bf16.mxu0 0
      %936 = vmatmul.mubr.bf16.gmra.mrb[0].mxu0 %v633
      %v937 = vpop.f32.mrb[0].mxu0
      %v938 = vadd.f32 0.0, %v937
      %v939 = vpop.f32.mrb[0].mxu0
      %v940 = vadd.f32 0.0, %v939
      %v941 = vpop.f32.mrb[0].mxu0
      %v942 = vadd.f32 0.0, %v941
      %v943 = vpop.f32.mrb[0].mxu0
      %v944 = vadd.f32 0.0, %v943
      %945 = vmatprep.mubr.bf16.mxu0 0
      %946 = vmatmul.mubr.bf16.gmra.mrb[0].mxu0 %v636
      %v947 = vpop.f32.mrb[0].mxu0
      %v948 = vadd.f32 0.0, %v947
      %v949 = vpop.f32.mrb[0].mxu0
      %v950 = vadd.f32 0.0, %v949
      %v951 = vpop.f32.mrb[0].mxu0
      %v952 = vadd.f32 0.0, %v951
      %v953 = vpop.f32.mrb[0].mxu0
      %v954 = vadd.f32 0.0, %v953
      %955 = vmatprep.mubr.bf16.mxu0 0
      %956 = vmatmul.mubr.bf16.gmra.mrb[0].mxu0 %v639
      %v957 = vpop.f32.mrb[0].mxu0
      %v958 = vadd.f32 0.0, %v957
      %v959 = vpop.f32.mrb[0].mxu0
      %v960 = vadd.f32 0.0, %v959
      %v961 = vpop.f32.mrb[0].mxu0
      %v962 = vadd.f32 0.0, %v961
      %v963 = vpop.f32.mrb[0].mxu0
      %v964 = vadd.f32 0.0, %v963
      %965 = vmatprep.mubr.bf16.mxu0 0
      %966 = vmatmul.mubr.bf16.gmra.mrb[0].mxu0 %v642
      %v967 = vpop.f32.mrb[0].mxu0
      %v968 = vadd.f32 0.0, %v967
      %v969 = vpop.f32.mrb[0].mxu0
      %v970 = vadd.f32 0.0, %v969
      %v971 = vpop.f32.mrb[0].mxu0
      %v972 = vadd.f32 0.0, %v971
      %v973 = vpop.f32.mrb[0].mxu0
      %v974 = vadd.f32 0.0, %v973
      %975 = vmatprep.mubr.bf16.mxu0 0
      %976 = vmatmul.mubr.bf16.gmra.mrb[0].mxu0 %v645
      %v977 = vpop.f32.mrb[0].mxu0
      %v978 = vadd.f32 0.0, %v977
      %v979 = vpop.f32.mrb[0].mxu0
      %v980 = vadd.f32 0.0, %v979
      %v981 = vpop.f32.mrb[0].mxu0
      %v982 = vadd.f32 0.0, %v981
      %v983 = vpop.f32.mrb[0].mxu0
      %v984 = vadd.f32 0.0, %v983
      %985 = vmatprep.mubr.bf16.mxu0 0
      %986 = vmatmul.mubr.bf16.gmra.mrb[0].mxu0 %v648
      %v987 = vpop.f32.mrb[0].mxu0
      %v988 = vadd.f32 0.0, %v987
      %v989 = vpop.f32.mrb[0].mxu0
      %v990 = vadd.f32 0.0, %v989
      %v991 = vpop.f32.mrb[0].mxu0
      %v992 = vadd.f32 0.0, %v991
      %v993 = vpop.f32.mrb[0].mxu0
      %v994 = vadd.f32 0.0, %v993
      %995 = vmatprep.mubr.bf16.mxu0 0
      %996 = vmatmul.mubr.bf16.gmra.mrb[0].mxu0 %v651
      %v997 = vpop.f32.mrb[0].mxu0
      %v998 = vadd.f32 0.0, %v997
      %v999 = vpop.f32.mrb[0].mxu0
      %v1000 = vadd.f32 0.0, %v999
      %v1001 = vpop.f32.mrb[0].mxu0
      %v1002 = vadd.f32 0.0, %v1001
      %v1003 = vpop.f32.mrb[0].mxu0
      %v1004 = vadd.f32 0.0, %v1003
      %1005 = vdwg.mxu0
      %1006 = vst [vmem:[%s204] sm:$0xff] %v688
      %vm1007 = vcmask 334848
      %1008 = vst.msk [vmem:[%s204 + $0x8] sm:$0xff] %vm1007, %v690
      %1009 = vst [vmem:[%s204 + $0x10] sm:$0xff] %v692
      %1010 = vst.msk [vmem:[%s204 + $0x18] sm:$0xff] %vm1007, %v694
      %1011 = vst [vmem:[%s204 + $0x20] sm:$0xff] %v698
      %1012 = vst.msk [vmem:[%s204 + $0x28] sm:$0xff] %vm1007, %v700
      %1013 = vst [vmem:[%s204 + $0x30] sm:$0xff] %v702
      %1014 = vst.msk [vmem:[%s204 + $0x38] sm:$0xff] %vm1007, %v704
      %1015 = vst [vmem:[%s204 + $0x40] sm:$0xff] %v708
      %1016 = vst.msk [vmem:[%s204 + $0x48] sm:$0xff] %vm1007, %v710
      %1017 = vst [vmem:[%s204 + $0x50] sm:$0xff] %v712
      %1018 = vst.msk [vmem:[%s204 + $0x58] sm:$0xff] %vm1007, %v714
      %1019 = vst [vmem:[%s204 + $0x60] sm:$0xff] %v718
      %1020 = vst.msk [vmem:[%s204 + $0x68] sm:$0xff] %vm1007, %v720
      %1021 = vst [vmem:[%s204 + $0x70] sm:$0xff] %v722
      %1022 = vst.msk [vmem:[%s204 + $0x78] sm:$0xff] %vm1007, %v724
      %1023 = vst [vmem:[%s204 + $0x80] sm:$0xff] %v728
      %1024 = vst.msk [vmem:[%s204 + $0x88] sm:$0xff] %vm1007, %v730
      %1025 = vst [vmem:[%s204 + $0x90] sm:$0xff] %v732
      %1026 = vst.msk [vmem:[%s204 + $0x98] sm:$0xff] %vm1007, %v734
      %1027 = vst [vmem:[%s204 + $0xa0] sm:$0xff] %v738
      %1028 = vst.msk [vmem:[%s204 + $0xa8] sm:$0xff] %vm1007, %v740
      %1029 = vst [vmem:[%s204 + $0xb0] sm:$0xff] %v742
      %1030 = vst.msk [vmem:[%s204 + $0xb8] sm:$0xff] %vm1007, %v744
      %1031 = vst [vmem:[%s204 + $0xc0] sm:$0xff] %v748
      %1032 = vst.msk [vmem:[%s204 + $0xc8] sm:$0xff] %vm1007, %v750
      %1033 = vst [vmem:[%s204 + $0xd0] sm:$0xff] %v752
      %1034 = vst.msk [vmem:[%s204 + $0xd8] sm:$0xff] %vm1007, %v754
      %1035 = vst [vmem:[%s204 + $0xe0] sm:$0xff] %v758
      %1036 = vst.msk [vmem:[%s204 + $0xe8] sm:$0xff] %vm1007, %v760
      %1037 = vst [vmem:[%s204 + $0xf0] sm:$0xff] %v762
      %1038 = vst.msk [vmem:[%s204 + $0xf8] sm:$0xff] %vm1007, %v764
      %1039 = vst [vmem:[%s204 + $0x100] sm:$0xff] %v768
      %1040 = vst.msk [vmem:[%s204 + $0x108] sm:$0xff] %vm1007, %v770
      %1041 = vst [vmem:[%s204 + $0x110] sm:$0xff] %v772
      %1042 = vst.msk [vmem:[%s204 + $0x118] sm:$0xff] %vm1007, %v774
      %1043 = vst [vmem:[%s204 + $0x120] sm:$0xff] %v778
      %1044 = vst.msk [vmem:[%s204 + $0x128] sm:$0xff] %vm1007, %v780
      %1045 = vst [vmem:[%s204 + $0x130] sm:$0xff] %v782
      %1046 = vst.msk [vmem:[%s204 + $0x138] sm:$0xff] %vm1007, %v784
      %1047 = vst [vmem:[%s204 + $0x140] sm:$0xff] %v788
      %1048 = vst.msk [vmem:[%s204 + $0x148] sm:$0xff] %vm1007, %v790
      %1049 = vst [vmem:[%s204 + $0x150] sm:$0xff] %v792
      %1050 = vst.msk [vmem:[%s204 + $0x158] sm:$0xff] %vm1007, %v794
      %1051 = vst [vmem:[%s204 + $0x160] sm:$0xff] %v798
      %1052 = vst.msk [vmem:[%s204 + $0x168] sm:$0xff] %vm1007, %v800
      %1053 = vst [vmem:[%s204 + $0x170] sm:$0xff] %v802
      %1054 = vst.msk [vmem:[%s204 + $0x178] sm:$0xff] %vm1007, %v804
      %1055 = vst [vmem:[%s204 + $0x180] sm:$0xff] %v808
      %1056 = vst.msk [vmem:[%s204 + $0x188] sm:$0xff] %vm1007, %v810
      %1057 = vst [vmem:[%s204 + $0x190] sm:$0xff] %v812
      %1058 = vst.msk [vmem:[%s204 + $0x198] sm:$0xff] %vm1007, %v814
      %1059 = vst [vmem:[%s204 + $0x1a0] sm:$0xff] %v818
      %1060 = vst.msk [vmem:[%s204 + $0x1a8] sm:$0xff] %vm1007, %v820
      %1061 = vst [vmem:[%s204 + $0x1b0] sm:$0xff] %v822
      %1062 = vst.msk [vmem:[%s204 + $0x1b8] sm:$0xff] %vm1007, %v824
      %1063 = vst [vmem:[%s204 + $0x1c0] sm:$0xff] %v828
      %1064 = vst.msk [vmem:[%s204 + $0x1c8] sm:$0xff] %vm1007, %v830
      %1065 = vst [vmem:[%s204 + $0x1d0] sm:$0xff] %v832
      %1066 = vst.msk [vmem:[%s204 + $0x1d8] sm:$0xff] %vm1007, %v834
      %1067 = vst [vmem:[%s204 + $0x1e0] sm:$0xff] %v838
      %1068 = vst.msk [vmem:[%s204 + $0x1e8] sm:$0xff] %vm1007, %v840
      %1069 = vst [vmem:[%s204 + $0x1f0] sm:$0xff] %v842
      %1070 = vst.msk [vmem:[%s204 + $0x1f8] sm:$0xff] %vm1007, %v844
      %1071 = vst [vmem:[%s204 + $0x200] sm:$0xff] %v848
      %1072 = vst.msk [vmem:[%s204 + $0x208] sm:$0xff] %vm1007, %v850
      %1073 = vst [vmem:[%s204 + $0x210] sm:$0xff] %v852
      %1074 = vst.msk [vmem:[%s204 + $0x218] sm:$0xff] %vm1007, %v854
      %1075 = vst [vmem:[%s204 + $0x220] sm:$0xff] %v858
      %1076 = vst.msk [vmem:[%s204 + $0x228] sm:$0xff] %vm1007, %v860
      %1077 = vst [vmem:[%s204 + $0x230] sm:$0xff] %v862
      %1078 = vst.msk [vmem:[%s204 + $0x238] sm:$0xff] %vm1007, %v864
      %1079 = vst [vmem:[%s204 + $0x240] sm:$0xff] %v868
      %1080 = vst.msk [vmem:[%s204 + $0x248] sm:$0xff] %vm1007, %v870
      %1081 = vst [vmem:[%s204 + $0x250] sm:$0xff] %v872
      %1082 = vst.msk [vmem:[%s204 + $0x258] sm:$0xff] %vm1007, %v874
      %1083 = vst [vmem:[%s204 + $0x260] sm:$0xff] %v878
      %1084 = vst.msk [vmem:[%s204 + $0x268] sm:$0xff] %vm1007, %v880
      %1085 = vst [vmem:[%s204 + $0x270] sm:$0xff] %v882
      %1086 = vst.msk [vmem:[%s204 + $0x278] sm:$0xff] %vm1007, %v884
      %1087 = vst [vmem:[%s204 + $0x280] sm:$0xff] %v888
      %1088 = vst.msk [vmem:[%s204 + $0x288] sm:$0xff] %vm1007, %v890
      %1089 = vst [vmem:[%s204 + $0x290] sm:$0xff] %v892
      %1090 = vst.msk [vmem:[%s204 + $0x298] sm:$0xff] %vm1007, %v894
      %1091 = vst [vmem:[%s204 + $0x2a0] sm:$0xff] %v898
      %1092 = vst.msk [vmem:[%s204 + $0x2a8] sm:$0xff] %vm1007, %v900
      %1093 = vst [vmem:[%s204 + $0x2b0] sm:$0xff] %v902
      %1094 = vst.msk [vmem:[%s204 + $0x2b8] sm:$0xff] %vm1007, %v904
      %1095 = vst [vmem:[%s204 + $0x2c0] sm:$0xff] %v908
      %1096 = vst.msk [vmem:[%s204 + $0x2c8] sm:$0xff] %vm1007, %v910
      %1097 = vst [vmem:[%s204 + $0x2d0] sm:$0xff] %v912
      %1098 = vst.msk [vmem:[%s204 + $0x2d8] sm:$0xff] %vm1007, %v914
      %1099 = vst [vmem:[%s204 + $0x2e0] sm:$0xff] %v918
      %1100 = vst.msk [vmem:[%s204 + $0x2e8] sm:$0xff] %vm1007, %v920
      %1101 = vst [vmem:[%s204 + $0x2f0] sm:$0xff] %v922
      %1102 = vst.msk [vmem:[%s204 + $0x2f8] sm:$0xff] %vm1007, %v924
      %1103 = vst [vmem:[%s204 + $0x300] sm:$0xff] %v928
      %1104 = vst.msk [vmem:[%s204 + $0x308] sm:$0xff] %vm1007, %v930
      %1105 = vst [vmem:[%s204 + $0x310] sm:$0xff] %v932
      %1106 = vst.msk [vmem:[%s204 + $0x318] sm:$0xff] %vm1007, %v934
      %1107 = vst [vmem:[%s204 + $0x320] sm:$0xff] %v938
      %1108 = vst.msk [vmem:[%s204 + $0x328] sm:$0xff] %vm1007, %v940
      %1109 = vst [vmem:[%s204 + $0x330] sm:$0xff] %v942
      %1110 = vst.msk [vmem:[%s204 + $0x338] sm:$0xff] %vm1007, %v944
      %1111 = vst [vmem:[%s204 + $0x340] sm:$0xff] %v948
      %1112 = vst.msk [vmem:[%s204 + $0x348] sm:$0xff] %vm1007, %v950
      %1113 = vst [vmem:[%s204 + $0x350] sm:$0xff] %v952
      %1114 = vst.msk [vmem:[%s204 + $0x358] sm:$0xff] %vm1007, %v954
      %1115 = vst [vmem:[%s204 + $0x360] sm:$0xff] %v958
      %1116 = vst.msk [vmem:[%s204 + $0x368] sm:$0xff] %vm1007, %v960
      %1117 = vst [vmem:[%s204 + $0x370] sm:$0xff] %v962
      %1118 = vst.msk [vmem:[%s204 + $0x378] sm:$0xff] %vm1007, %v964
      %1119 = vst [vmem:[%s204 + $0x380] sm:$0xff] %v968
      %1120 = vst.msk [vmem:[%s204 + $0x388] sm:$0xff] %vm1007, %v970
      %1121 = vst [vmem:[%s204 + $0x390] sm:$0xff] %v972
      %1122 = vst.msk [vmem:[%s204 + $0x398] sm:$0xff] %vm1007, %v974
      %1123 = vst [vmem:[%s204 + $0x3a0] sm:$0xff] %v978
      %1124 = vst.msk [vmem:[%s204 + $0x3a8] sm:$0xff] %vm1007, %v980
      %1125 = vst [vmem:[%s204 + $0x3b0] sm:$0xff] %v982
      %1126 = vst.msk [vmem:[%s204 + $0x3b8] sm:$0xff] %vm1007, %v984
      %1127 = vst [vmem:[%s204 + $0x3c0] sm:$0xff] %v988
      %1128 = vst.msk [vmem:[%s204 + $0x3c8] sm:$0xff] %vm1007, %v990
      %1129 = vst [vmem:[%s204 + $0x3d0] sm:$0xff] %v992
      %1130 = vst.msk [vmem:[%s204 + $0x3d8] sm:$0xff] %vm1007, %v994
      %1131 = vst [vmem:[%s204 + $0x3e0] sm:$0xff] %v998
      %1132 = vst.msk [vmem:[%s204 + $0x3e8] sm:$0xff] %vm1007, %v1000
      %1133 = vst [vmem:[%s204 + $0x3f0] sm:$0xff] %v1002
      %1134 = vst.msk [vmem:[%s204 + $0x3f8] sm:$0xff] %vm1007, %v1004
      %s1135 = smul.u32 2, %s15
      %p1136 = scmp.lt.s32.totalorder %s1135, 3
      %s1137 = scalar_select %p1136, %s1135, 3
      %s1138 = smul.addr %s1137, 64
      %s1139 = smul.addr %s1138, 8
      %s1140 = scalar_lea.vmem %s4, %s1139
      // Predicated region
      $region37: #{merge_feature_tsm.1} parent=35 // pred_check
        %p1141 = pneg %p122
      $region38: #{merge_feature_tsm.1} parent=35 // pred_check_branch
        %1143 = sbr.rel (%p1141) target = $region40
      $region39: #{merge_feature_tsm.1} parent=35 // pred_region
        %s1144 = smul.u32 2, %s15
      $region40: #{merge_feature_tsm.1} parent=35 // pred_fallthru
        _
    $region36: #{merge_feature_tsm.1} parent=5 // pred_fallthru
      _
    %p1145 = scmp.le.s32.totalorder 2, %s10
    // Predicated region
    $region41: #{merge_feature_tsm.1} parent=5 // pred_check
      %p1146 = pneg %p1145
    $region42: #{merge_feature_tsm.1} parent=5 // pred_check_branch
      %1148 = sbr.rel (%p1146) target = $region44
    $region43: #{merge_feature_tsm.1} parent=5 // pred_region
      %s1149 = ssub.s32 %s10, 2
      // Predicated region
      $region45: #{merge_feature_tsm.1} parent=43 // pred_check
        %p1150 = pneg %p128
      $region46: #{merge_feature_tsm.1} parent=43 // pred_check_branch
        %1152 = sbr.rel (%p1150) target = $region48
      $region47: #{merge_feature_tsm.1} parent=43 // pred_region
        %s1153 = smul.u32 2, %s16
        %p1154 = scmp.lt.s32.totalorder %s1153, 3
        %s1155 = scalar_select %p1154, %s1153, 3
        %s1156 = smul.addr %s1155, 64
        %s1157 = smul.addr %s1156, 8
        %s1158 = scalar_lea.vmem %s4, %s1157
      $region48: #{merge_feature_tsm.1} parent=43 // pred_fallthru
        _
    $region44: #{merge_feature_tsm.1} parent=5 // pred_fallthru
      _
  $region6: #{merge_feature_tsm.1} parent=0 // loop_footer
    %s14 = sadd.s32 1, %s10
  $region7: #{merge_feature_tsm.1} parent=0 // loop_footer_branch
    %9 = sbr.rel target = $region3
  $region8: #{merge_feature_tsm.1} parent=0 // loop_exit
    _

</llo_original>
